<compile_context>
chip_gen: v5e
topology: v5e:2x2
jax: 0.10.0
libtpu: 0.0.40
codegen_flags: <defaults>
</compile_context>

<pallas_src>
import functools

import jax
import jax.numpy as jnp
from jax import lax
from jax.experimental import pallas as pl
from jax.experimental.pallas import tpu as pltpu


_LANE = 128


def _round_up(x, m):
    return (x + m - 1) // m * m


def _sublane_unit(dtype):
    # second-to-last block dim multiple: 8 for 4-byte, 16 for 2-byte, 32 for 1-byte
    return max(8, 32 // jnp.dtype(dtype).itemsize)


def _tpu_profile():
    """Returns (vmem_limit_bytes, block_target_bytes, min_parallel_grid_steps)."""
    vmem = None
    try:
        info = pltpu.get_tpu_info()
        vmem = getattr(info, "vmem_capacity_bytes", None)
    except Exception:
        vmem = None
    if vmem is None:
        # Unknown generation: conservative settings that are safe everywhere.
        return 32 * 1024 * 1024, 4 * 1024 * 1024, 2
    if vmem <= 96 * 1024 * 1024:
        # v7x-style chip: 64 MiB VMEM per TensorCore, 2 TCs share parallel axes.
        return 32 * 1024 * 1024, 4 * 1024 * 1024, 4
    # v5e / v6e: 128 MiB physical VMEM, single TensorCore.
    return 64 * 1024 * 1024, 8 * 1024 * 1024, 2


def _pick_tile(total, unit, bytes_per_unit, block_target, min_steps):
    """Tile length along one axis: a multiple of `unit`, or the full extent.

    Sized so one block is ~block_target bytes (f32-effective, i.e. counting
    the in-kernel f32 intermediates), while keeping >= `min_steps` grid steps
    when the axis is big enough (pipelining; per-TC double buffering when the
    parallel axis is sharded across v7x's 2 TensorCores).
    """
    target = max(unit, (block_target // max(bytes_per_unit, 1)) // unit * unit)
    if total <= min_steps * unit:
        return total                                    # tiny axis: one full-extent block
    cap = _round_up(pl.cdiv(total, min_steps), unit)    # guarantees >= min_steps grid steps
    return min(total, max(unit, min(target, cap)))


# ----------------------------- kernels ------------------------------------


def _ln_lastdim_kernel(x_ref, w_ref, b_ref, o_ref, *, eps):
    # x_ref: (tile_rows, C); normalize each row over C (lane reduction).
    x = x_ref[...].astype(jnp.float32)
    mu = jnp.mean(x, axis=-1, keepdims=True)
    xc = x - mu
    var = jnp.mean(xc * xc, axis=-1, keepdims=True)
    y = xc * lax.rsqrt(var + eps)
    y = y * w_ref[...].astype(jnp.float32) + b_ref[...].astype(jnp.float32)
    o_ref[...] = y.astype(o_ref.dtype)


def _ln_packed_kernel(x_ref, red_ref, exp_ref, w_ref, b_ref, o_ref, *, eps, inv_c):
    # x_ref: (tile_rows, 128) where each packed row holds G=128//C original rows.
    # red_ref: (128, G) 0/1 segment-reduce matrix; exp_ref: (G, 128) broadcast-back.
    x = x_ref[...].astype(jnp.float32)
    red = red_ref[...]
    expd = exp_ref[...]
    hi = lax.Precision.HIGHEST
    sums = jnp.dot(x, red, preferred_element_type=jnp.float32, precision=hi)      # (T, G)
    mu_b = jnp.dot(sums, expd, preferred_element_type=jnp.float32, precision=hi) * inv_c
    xc = x - mu_b
    var = jnp.dot(xc * xc, red, preferred_element_type=jnp.float32, precision=hi) * inv_c
    inv = lax.rsqrt(var + eps)                                                    # (T, G)
    inv_b = jnp.dot(inv, expd, preferred_element_type=jnp.float32, precision=hi)  # (T, 128)
    y = xc * inv_b * w_ref[...].astype(jnp.float32) + b_ref[...].astype(jnp.float32)
    o_ref[...] = y.astype(o_ref.dtype)


def _ln_channels_first_kernel(x_ref, w_ref, b_ref, o_ref, *, eps):
    # x_ref: (TILE_N, C, TILE_HW); normalize over C (sublane axis), lanes = spatial.
    x = x_ref[...].astype(jnp.float32)
    mu = jnp.mean(x, axis=1, keepdims=True)
    xc = x - mu
    var = jnp.mean(xc * xc, axis=1, keepdims=True)
    y = xc * lax.rsqrt(var + eps)
    y = y * w_ref[...].astype(jnp.float32) + b_ref[...].astype(jnp.float32)  # (1, C, 1) broadcast
    o_ref[...] = y.astype(o_ref.dtype)


# ----------------------------- wrappers ------------------------------------


def _layernorm_lastdim(x2d, weight, bias, eps):
    rows, c = x2d.shape
    dtype = x2d.dtype
    eff = max(jnp.dtype(dtype).itemsize, 4)      # f32-effective bytes per element
    unit = _sublane_unit(dtype)
    vmem_limit, block_target, min_steps = _tpu_profile()

    params = pltpu.CompilerParams(
        dimension_semantics=("parallel",),
        vmem_limit_bytes=vmem_limit,
    )

    packed = (0 < c < _LANE) and (_LANE % c == 0)
    if packed:
        # Lane-dense view: (rows, C) -> (rows/G, 128).  Pad rows to a multiple
        # of G so every small-C shape takes this path (full, unmasked vst).
        g = _LANE // c
        pad = (-rows) % g
        rows_p = rows + pad
        if pad:
            x2d = jnp.pad(x2d, ((0, pad), (0, 0)))
        rp = rows_p // g
        xp = x2d.reshape(rp, _LANE)
        wp = jnp.tile(weight, g).reshape(1, _LANE)
        bp = jnp.tile(bias, g).reshape(1, _LANE)
        lane_group = jnp.arange(_LANE, dtype=jnp.int32) // c
        grp = jnp.arange(g, dtype=jnp.int32)
        red = (lane_group[:, None] == grp[None, :]).astype(jnp.float32)   # (128, G)
        expd = (grp[:, None] == lane_group[None, :]).astype(jnp.float32)  # (G, 128)

        tile = _pick_tile(rp, unit, _LANE * eff, block_target, min_steps)
        kernel = functools.partial(_ln_packed_kernel, eps=eps, inv_c=1.0 / c)
        yp = pl.pallas_call(
            kernel,
            out_shape=jax.ShapeDtypeStruct((rp, _LANE), dtype),
            grid_spec=pltpu.PrefetchScalarGridSpec(
                num_scalar_prefetch=0,
                grid=(pl.cdiv(rp, tile),),
                in_specs=[
                    pl.BlockSpec((tile, _LANE), lambda i: (i, 0)),
                    pl.BlockSpec((_LANE, g), lambda i: (0, 0)),
                    pl.BlockSpec((g, _LANE), lambda i: (0, 0)),
                    pl.BlockSpec((1, _LANE), lambda i: (0, 0)),
                    pl.BlockSpec((1, _LANE), lambda i: (0, 0)),
                ],
                out_specs=pl.BlockSpec((tile, _LANE), lambda i: (i, 0)),
            ),
            compiler_params=params,
        )(xp, red, expd, wp, bp)
        y = yp.reshape(rows_p, c)
        return y[:rows] if pad else y

    # Plain path: C >= 128 (already lane-dense) or C that 128 doesn't divide.
    # TODO(synk): for f32 C in the 100k+ range, split C onto an 'arbitrary'
    # reduction grid axis with sum/sumsq accumulators to stay within VMEM.
    c_pad = _round_up(c, _LANE)
    tile = _pick_tile(rows, unit, c_pad * eff, block_target, min_steps)
    w2d = weight.reshape(1, c)
    b2d = bias.reshape(1, c)
    kernel = functools.partial(_ln_lastdim_kernel, eps=eps)
    return pl.pallas_call(
        kernel,
        out_shape=jax.ShapeDtypeStruct((rows, c), dtype),
        grid_spec=pltpu.PrefetchScalarGridSpec(
            num_scalar_prefetch=0,
            grid=(pl.cdiv(rows, tile),),
            in_specs=[
                pl.BlockSpec((tile, c), lambda i: (i, 0)),
                pl.BlockSpec((1, c), lambda i: (0, 0)),
                pl.BlockSpec((1, c), lambda i: (0, 0)),
            ],
            out_specs=pl.BlockSpec((tile, c), lambda i: (i, 0)),
        ),
        compiler_params=params,
    )(x2d, w2d, b2d)


def _layernorm_channels_first(x, weight, bias, eps):
    # x: (N, C, H, W) -> view as (N, C, H*W); no transposes.
    n, c, h, w = x.shape
    hw = h * w
    dtype = x.dtype
    eff = max(jnp.dtype(dtype).itemsize, 4)      # f32-effective bytes per element
    vmem_limit, block_target, min_steps = _tpu_profile()

    x3 = x.reshape(n, c, hw)
    w3 = weight.reshape(1, c, 1)
    b3 = bias.reshape(1, c, 1)
    c_pad = _round_up(c, _sublane_unit(dtype))
    batch_bytes = c_pad * _round_up(hw, _LANE) * eff   # VMEM bytes of one batch slab

    if batch_bytes >= block_target or n == 1:
        # One batch element per block; tile the spatial axis.
        tile_n = 1
        min_steps_hw = max(1, pl.cdiv(min_steps, n))
        tile_hw = _pick_tile(hw, _LANE, c_pad * eff, block_target, min_steps_hw)
    else:
        # Small per-batch slabs (e.g. C=4, small HW): fold several batch
        # elements into one block so each grid step moves ~block_target bytes
        # instead of being dominated by the ~0.35 us fixed per-step overhead.
        tile_hw = hw
        tile_n = _pick_tile(n, 1, batch_bytes, block_target, min_steps)

    kernel = functools.partial(_ln_channels_first_kernel, eps=eps)
    y3 = pl.pallas_call(
        kernel,
        out_shape=jax.ShapeDtypeStruct((n, c, hw), dtype),
        grid_spec=pltpu.PrefetchScalarGridSpec(
            num_scalar_prefetch=0,
            grid=(pl.cdiv(n, tile_n), pl.cdiv(hw, tile_hw)),
            in_specs=[
                pl.BlockSpec((tile_n, c, tile_hw), lambda i, j: (i, 0, j)),
                pl.BlockSpec((1, c, 1), lambda i, j: (0, 0, 0)),
                pl.BlockSpec((1, c, 1), lambda i, j: (0, 0, 0)),
            ],
            out_specs=pl.BlockSpec((tile_n, c, tile_hw), lambda i, j: (i, 0, j)),
        ),
        compiler_params=pltpu.CompilerParams(
            dimension_semantics=("parallel", "parallel"),
            vmem_limit_bytes=vmem_limit,
        ),
    )(x3, w3, b3)
    return y3.reshape(n, c, h, w)


def layer_norm(x, weight, bias, *, eps=1e-6, data_format="channels_last"):
    """Matches model/ssgcn.py::LayerNorm.forward (eps comes from the module; default 1e-6)."""
    if data_format not in ("channels_last", "channels_first"):
        raise NotImplementedError
    if data_format == "channels_last":
        c = x.shape[-1]
        lead = x.shape[:-1]
        y2d = _layernorm_lastdim(x.reshape(-1, c), weight, bias, eps)
        return y2d.reshape(*lead, c)
    return _layernorm_channels_first(x, weight, bias, eps)


# ----------------------------- reference / test -----------------------------


def _reference(x, weight, bias, eps, data_format):
    if data_format == "channels_last":
        mu = jnp.mean(x, axis=-1, keepdims=True)
        var = jnp.mean((x - mu) ** 2, axis=-1, keepdims=True)
        return (x - mu) / jnp.sqrt(var + eps) * weight + bias
    mu = jnp.mean(x, axis=1, keepdims=True)
    var = jnp.mean((x - mu) ** 2, axis=1, keepdims=True)
    xn = (x - mu) / jnp.sqrt(var + eps)
    return weight[None, :, None, None] * xn + bias[None, :, None, None]


def _check(y, ref):
    assert jnp.allclose(y, ref, atol=2e-5, rtol=2e-5), float(jnp.max(jnp.abs(y - ref)))


if __name__ == "__main__":
    key = jax.random.PRNGKey(0)
    ks = jax.random.split(key, 10)

    # channels_first: NCHW, normalized over C=4 (sublane reduction; batch-folded blocks)
    x_cf = jax.random.normal(ks[0], (2, 4, 16, 16), dtype=jnp.float32)
    w_cf = 1.0 + 0.1 * jax.random.normal(ks[1], (4,), dtype=jnp.float32)
    b_cf = 0.1 * jax.random.normal(ks[2], (4,), dtype=jnp.float32)
    y_cf = jax.block_until_ready(
        layer_norm(x_cf, w_cf, b_cf, eps=1e-6, data_format="channels_first"))
    _check(y_cf, _reference(x_cf, w_cf, b_cf, 1e-6, "channels_first"))

    # channels_last: NHWC, C=32 (lane-dense packed kernel, rows divisible by G)
    x_cl = jax.random.normal(ks[3], (2, 8, 8, 32), dtype=jnp.float32)
    w_cl = 1.0 + 0.1 * jax.random.normal(ks[4], (32,), dtype=jnp.float32)
    b_cl = 0.1 * jax.random.normal(ks[5], (32,), dtype=jnp.float32)
    y_cl = jax.block_until_ready(
        layer_norm(x_cl, w_cl, b_cl, eps=1e-6, data_format="channels_last"))
    _check(y_cl, _reference(x_cl, w_cl, b_cl, 1e-6, "channels_last"))

    # channels_last: C=128 (plain, already lane-dense path)
    x_big = jax.random.normal(ks[6], (2, 4, 4, 128), dtype=jnp.float32)
    w_big = 1.0 + 0.1 * jax.random.normal(ks[7], (128,), dtype=jnp.float32)
    b_big = 0.1 * jax.random.normal(ks[8], (128,), dtype=jnp.float32)
    y_big = jax.block_until_ready(
        layer_norm(x_big, w_big, b_big, eps=1e-6, data_format="channels_last"))
    _check(y_big, _reference(x_big, w_big, b_big, 1e-6, "channels_last"))

    # channels_last, ragged row count (105 rows, C=32): now padded so it STILL
    # takes the lane-dense packed path instead of falling back to masked stores.
    x_rg = jax.random.normal(ks[9], (3, 5, 7, 32), dtype=jnp.float32)
    y_rg = jax.block_until_ready(
        layer_norm(x_rg, w_cl, b_cl, eps=1e-6, data_format="channels_last"))
    _check(y_rg, _reference(x_rg, w_cl, b_cl, 1e-6, "channels_last"))

    # channels_last, tiny C=4 (exercises the relaxed small-C packed path, G=32)
    x_c4 = jax.random.normal(ks[0], (2, 6, 6, 4), dtype=jnp.float32)
    y_c4 = jax.block_until_ready(
        layer_norm(x_c4, w_cf, b_cf, eps=1e-6, data_format="channels_last"))
    _check(y_c4, _reference(x_c4, w_cf, b_cf, 1e-6, "channels_last"))

    print("KERNEL_OK")
</pallas_src>

<mosaic_0001>
module attributes {stable_mosaic.version = 11 : i64} {
  func.func @_ln_channels_first_kernel(%arg0: i32, %arg1: i32, %arg2: memref<2x4x256xf32, #tpu.memory_space<vmem>>, %arg3: memref<1x4x1xf32, #tpu.memory_space<vmem>>, %arg4: memref<1x4x1xf32, #tpu.memory_space<vmem>>, %arg5: memref<2x4x256xf32, #tpu.memory_space<vmem>>) attributes {dimension_semantics = [#tpu.dimension_semantics<parallel>, #tpu.dimension_semantics<parallel>], iteration_bounds = array<i64: 1, 1>, scalar_prefetch = 0 : i64, scratch_operands = 0 : i64, tpu.core_type = #tpu.core_type<tc>, window_params = [{transform_indices = @transform_0, window_bounds = array<i64: 2, 4, 256>}, {pipeline_mode = #tpu.pipeline_mode<synchronous>, transform_indices = @transform_1, window_bounds = array<i64: 1, 4, 1>}, {pipeline_mode = #tpu.pipeline_mode<synchronous>, transform_indices = @transform_2, window_bounds = array<i64: 1, 4, 1>}, {transform_indices = @transform_3, window_bounds = array<i64: 2, 4, 256>}]} {
    %c0 = arith.constant 0 : index
    %c0_0 = arith.constant 0 : index
    %c0_1 = arith.constant 0 : index
    %0 = vector.load %arg2[%c0, %c0_0, %c0_1] : memref<2x4x256xf32, #tpu.memory_space<vmem>>, vector<2x4x256xf32>
    %cst = arith.constant dense<0.000000e+00> : vector<2x256xf32>
    %1 = vector.multi_reduction <add>, %0, %cst [1] : vector<2x4x256xf32> to vector<2x256xf32>
    %2 = vector.shape_cast %1 : vector<2x256xf32> to vector<2x1x256xf32>
    %cst_2 = arith.constant 4.000000e+00 : f32
    %3 = vector.broadcast %cst_2 : f32 to vector<2x1x256xf32>
    %4 = arith.divf %2, %3 : vector<2x1x256xf32>
    %5 = vector.broadcast %4 : vector<2x1x256xf32> to vector<2x4x256xf32>
    %6 = arith.subf %0, %5 : vector<2x4x256xf32>
    %7 = arith.mulf %6, %6 : vector<2x4x256xf32>
    %cst_3 = arith.constant dense<0.000000e+00> : vector<2x256xf32>
    %8 = vector.multi_reduction <add>, %7, %cst_3 [1] : vector<2x4x256xf32> to vector<2x256xf32>
    %9 = vector.shape_cast %8 : vector<2x256xf32> to vector<2x1x256xf32>
    %cst_4 = arith.constant 4.000000e+00 : f32
    %10 = vector.broadcast %cst_4 : f32 to vector<2x1x256xf32>
    %11 = arith.divf %9, %10 : vector<2x1x256xf32>
    %cst_5 = arith.constant 9.99999997E-7 : f32
    %12 = vector.broadcast %cst_5 : f32 to vector<2x1x256xf32>
    %13 = arith.addf %11, %12 : vector<2x1x256xf32>
    %14 = math.rsqrt %13 : vector<2x1x256xf32>
    %15 = vector.broadcast %14 : vector<2x1x256xf32> to vector<2x4x256xf32>
    %16 = arith.mulf %6, %15 : vector<2x4x256xf32>
    %c0_6 = arith.constant 0 : index
    %c0_7 = arith.constant 0 : index
    %c0_8 = arith.constant 0 : index
    %17 = vector.load %arg3[%c0_6, %c0_7, %c0_8] : memref<1x4x1xf32, #tpu.memory_space<vmem>>, vector<1x4x1xf32>
    %18 = vector.broadcast %17 : vector<1x4x1xf32> to vector<2x4x256xf32>
    %19 = arith.mulf %16, %18 : vector<2x4x256xf32>
    %c0_9 = arith.constant 0 : index
    %c0_10 = arith.constant 0 : index
    %c0_11 = arith.constant 0 : index
    %20 = vector.load %arg4[%c0_9, %c0_10, %c0_11] : memref<1x4x1xf32, #tpu.memory_space<vmem>>, vector<1x4x1xf32>
    %21 = vector.broadcast %20 : vector<1x4x1xf32> to vector<2x4x256xf32>
    %22 = arith.addf %19, %21 : vector<2x4x256xf32>
    %c0_12 = arith.constant 0 : index
    %c0_13 = arith.constant 0 : index
    %c0_14 = arith.constant 0 : index
    %23 = vector.load %arg5[%c0_12, %c0_13, %c0_14] : memref<2x4x256xf32, #tpu.memory_space<vmem>>, vector<2x4x256xf32>
    tpu.vector_store %arg5[%c0_12, %c0_13, %c0_14], %22 {strides = array<i32>} : memref<2x4x256xf32, #tpu.memory_space<vmem>>, vector<2x4x256xf32>,
    return
  }
  func.func @transform_0(%arg0: i32, %arg1: i32) -> (i32, i32, i32) {
    %c0_i32 = arith.constant 0 : i32
    %c0_i32_0 = arith.constant 0 : i32
    return %arg0, %c0_i32, %arg1 : i32, i32, i32
  }
  func.func @transform_1(%arg0: i32, %arg1: i32) -> (i32, i32, i32) {
    %c0_i32 = arith.constant 0 : i32
    %c0_i32_0 = arith.constant 0 : i32
    %c0_i32_1 = arith.constant 0 : i32
    %c0_i32_2 = arith.constant 0 : i32
    return %c0_i32, %c0_i32_0, %c0_i32_1 : i32, i32, i32
  }
  func.func @transform_2(%arg0: i32, %arg1: i32) -> (i32, i32, i32) {
    %c0_i32 = arith.constant 0 : i32
    %c0_i32_0 = arith.constant 0 : i32
    %c0_i32_1 = arith.constant 0 : i32
    %c0_i32_2 = arith.constant 0 : i32
    return %c0_i32, %c0_i32_0, %c0_i32_1 : i32, i32, i32
  }
  func.func @transform_3(%arg0: i32, %arg1: i32) -> (i32, i32, i32) {
    %c0_i32 = arith.constant 0 : i32
    %c0_i32_0 = arith.constant 0 : i32
    return %arg0, %c0_i32, %arg1 : i32, i32, i32
  }
}

</mosaic_0001>

<llo_original>
// kernel: tpu_custom_call.1
$region0: #{tpu_custom_call.1}
  #allocation0 [shape = 'u32[]', space=smem, size = 0x4, offset = 0x4, fixed_abs, tag = 'smem constant byte address 0x4 - core index']
  #allocation1 [shape = 'u32[72,128]{1,0:T(1,128)}', space=vmem, size = 0x9000, scoped, tag = 'internal scratch']
  %s0 = inlined_call_operand.hbm [shape: f32[2,4,256], index: 0, kind: input, shape index: {}]
  %s1 = inlined_call_operand.vmem [shape: f32[1,4,1], index: 1, kind: input, shape index: {}]
  %s2 = inlined_call_operand.vmem [shape: f32[1,4,1], index: 2, kind: input, shape index: {}]
  %s3 = inlined_call_operand.hbm [shape: f32[2,4,256], index: 3, kind: output, shape index: {}]
  %s4 = sld [smem:[#allocation0]]
  $region26: #{tpu_custom_call.1} parent=0
    _
  %s6 = ssub.s32 1, %s4
  %s7 = scalar_select 0, %s6, %s4
  $region1: #{tpu_custom_call.1} parent=0
    #allocation2 [shape = 'u8[8192]{0}', space=vmem, size = 0x2000, scoped, tag = 'input window, operand 0, single buffered']
    #allocation3 [shape = 's32[1]{0}', space=sflag, size = 0x4, scoped, tag = 'scoped memory for tpu_custom_call.1']
    #allocation4 [shape = 's32[1]{0}', space=sflag, size = 0x4, scoped, tag = 'scoped memory for tpu_custom_call.1']
    #allocation5 [shape = 'u8[8192]{0}', space=vmem, size = 0x2000, scoped, tag = 'output window, operand 0, single buffered']
    %8 = vsyncpa [#allocation3], 0
    %9 = vsyncpa [#allocation4], 0
    // Predicated region
    $region2: #{tpu_custom_call.1} parent=1 // pred_check
      _
    $region3: #{tpu_custom_call.1} parent=1 // pred_check_branch
      %11 = sbr.rel (0) target = $region5
    $region4: #{tpu_custom_call.1} parent=1 // pred_region
      %13 = vsyncadd [#allocation3], 0
      %s14 = sshll.u32 %s0, 4
      %s15 = int_to_ptr.hbm [resolvable:$true] %s14
      %s16 = sshll.u32 [#allocation2], 4
      %s17 = int_to_ptr.vmem [resolvable:$true] %s16
      %22 = dma.hbm_to_vmem [thread:$0]  %s15, 256, %s17, [#allocation3], 128, 128, 8
    $region5: #{tpu_custom_call.1} parent=1 // pred_fallthru
      _
    // Predicated region
    $region6: #{tpu_custom_call.1} parent=1 // pred_check
      _
    $region7: #{tpu_custom_call.1} parent=1 // pred_check_branch
      %24 = sbr.rel (0) target = $region9
    $region8: #{tpu_custom_call.1} parent=1 // pred_region
      _
    $region9: #{tpu_custom_call.1} parent=1 // pred_fallthru
      _
    // Predicated region
    $region10: #{tpu_custom_call.1} parent=1 // pred_check
      _
    $region11: #{tpu_custom_call.1} parent=1 // pred_check_branch
      %26 = sbr.rel (0) target = $region13
    $region12: #{tpu_custom_call.1} parent=1 // pred_region
      _
    $region13: #{tpu_custom_call.1} parent=1 // pred_fallthru
      _
    // Predicated region
    $region14: #{tpu_custom_call.1} parent=1 // pred_check
      _
    $region15: #{tpu_custom_call.1} parent=1 // pred_check_branch
      %28 = sbr.rel (0) target = $region17
    $region16: #{tpu_custom_call.1} parent=1 // pred_region
      %30 = dma.done [#allocation3], 256
    $region17: #{tpu_custom_call.1} parent=1 // pred_fallthru
      _
    %v31 = vld [vmem:[#allocation2] sm:$0xff]
    %v32 = vld [vmem:[#allocation2 + $0x8] sm:$0xff]
    %35 = vst [vmem:[#allocation1] ss:$2 sm:$0xff] %v31
    %v36 = vld.sshfl [vmem:[#allocation1] sm:$0xff pattern:$0x75316420]
    %v37 = vld.sshfl [vmem:[#allocation1 + $0x8] sm:$0xff pattern:$0x75316420]
    %s38 = scalar_lea.vmem [#allocation1], 16
    %39 = vst [vmem:[%s38] ss:$2 sm:$0xff] %v32
    %v40 = vld.sshfl [vmem:[#allocation1 + $0x10] sm:$0xff pattern:$0x75316420]
    %v41 = vld.sshfl [vmem:[#allocation1 + $0x18] sm:$0xff pattern:$0x75316420]
    %vm46 = vcmask 1043456
    %v47 = vsel %vm46, %v36, 0.0
    %v48 = vrot.slane %v47, 4
    %v49 = vadd.f32 %v47, %v48
    %v50 = vrot.slane %v49, 2
    %v51 = vadd.f32 %v49, %v50
    %v52 = vrot.slane %v51, 1
    %v53 = vadd.f32 %v51, %v52
    %v54 = vsel %vm46, %v37, 0.0
    %v55 = vrot.slane %v54, 4
    %v56 = vadd.f32 %v54, %v55
    %v57 = vrot.slane %v56, 2
    %v58 = vadd.f32 %v56, %v57
    %v59 = vrot.slane %v58, 1
    %v60 = vadd.f32 %v58, %v59
    %v61 = vsel %vm46, %v40, 0.0
    %v62 = vrot.slane %v61, 4
    %v63 = vadd.f32 %v61, %v62
    %v64 = vrot.slane %v63, 2
    %v65 = vadd.f32 %v63, %v64
    %v66 = vrot.slane %v65, 1
    %v67 = vadd.f32 %v65, %v66
    %v68 = vsel %vm46, %v41, 0.0
    %v69 = vrot.slane %v68, 4
    %v70 = vadd.f32 %v68, %v69
    %v71 = vrot.slane %v70, 2
    %v72 = vadd.f32 %v70, %v71
    %v73 = vrot.slane %v72, 1
    %v74 = vadd.f32 %v72, %v73
    %v75 = vrcp.pop 4.0
    %v76 = vmul.f32 4.0, %v75
    %v77 = vsub.f32 1.0, %v76
    %v78 = vmul.f32 %v75, %v77
    %v79 = vadd.f32 %v75, %v78
    %vm80 = vweird.f32 %v75
    %v81 = vsel %vm80, %v75, %v79
    %v82 = vmul.f32 %v53, %v81
    %v83 = vmul.f32 %v60, %v81
    %v84 = vmul.f32 %v67, %v81
    %v85 = vmul.f32 %v74, %v81
    %v90 = vrot.slane %v83, 4
    %v91 = vrot.slane %v85, 4
    %v92 = vsel %vm46, %v82, %v90
    %v93 = vsel %vm46, %v84, %v91
    %v96 = vsub.f32 %v31, %v92
    %v97 = vsub.f32 %v32, %v93
    %v98 = vmul.f32 %v96, %v96
    %v99 = vmul.f32 %v97, %v97
    %102 = vst [vmem:[#allocation1] ss:$2 sm:$0xff] %v98
    %v103 = vld.sshfl [vmem:[#allocation1] sm:$0xff pattern:$0x75316420]
    %v104 = vld.sshfl [vmem:[#allocation1 + $0x8] sm:$0xff pattern:$0x75316420]
    %s105 = scalar_lea.vmem [#allocation1], 16
    %106 = vst [vmem:[%s105] ss:$2 sm:$0xff] %v99
    %v107 = vld.sshfl [vmem:[#allocation1 + $0x10] sm:$0xff pattern:$0x75316420]
    %v108 = vld.sshfl [vmem:[#allocation1 + $0x18] sm:$0xff pattern:$0x75316420]
    %v113 = vsel %vm46, %v103, 0.0
    %v114 = vrot.slane %v113, 4
    %v115 = vadd.f32 %v113, %v114
    %v116 = vrot.slane %v115, 2
    %v117 = vadd.f32 %v115, %v116
    %v118 = vrot.slane %v117, 1
    %v119 = vadd.f32 %v117, %v118
    %v120 = vsel %vm46, %v104, 0.0
    %v121 = vrot.slane %v120, 4
    %v122 = vadd.f32 %v120, %v121
    %v123 = vrot.slane %v122, 2
    %v124 = vadd.f32 %v122, %v123
    %v125 = vrot.slane %v124, 1
    %v126 = vadd.f32 %v124, %v125
    %v127 = vsel %vm46, %v107, 0.0
    %v128 = vrot.slane %v127, 4
    %v129 = vadd.f32 %v127, %v128
    %v130 = vrot.slane %v129, 2
    %v131 = vadd.f32 %v129, %v130
    %v132 = vrot.slane %v131, 1
    %v133 = vadd.f32 %v131, %v132
    %v134 = vsel %vm46, %v108, 0.0
    %v135 = vrot.slane %v134, 4
    %v136 = vadd.f32 %v134, %v135
    %v137 = vrot.slane %v136, 2
    %v138 = vadd.f32 %v136, %v137
    %v139 = vrot.slane %v138, 1
    %v140 = vadd.f32 %v138, %v139
    %v141 = vmul.f32 %v119, %v81
    %v142 = vmul.f32 %v126, %v81
    %v143 = vmul.f32 %v133, %v81
    %v144 = vmul.f32 %v140, %v81
    %v145 = vadd.f32 %v141, 1e-06
    %v146 = vadd.f32 %v142, 1e-06
    %v147 = vadd.f32 %v143, 1e-06
    %v148 = vadd.f32 %v144, 1e-06
    %v149 = vrsqrt.pop %v145
    %v150 = vmul.f32 %v149, %v145
    %v151 = vmul.f32 %v150, %v149
    %v152 = vmul.f32 0.5, %v151
    %v153 = vsub.f32 1.5, %v152
    %v154 = vmul.f32 %v149, %v153
    %vm155 = vweird.f32 %v145
    %vm156 = vweird.f32 %v149
    %vm157 = vmor %vm155, %vm156
    %v158 = vsel %vm157, %v149, %v154
    %v159 = vrsqrt.pop %v146
    %v160 = vmul.f32 %v159, %v146
    %v161 = vmul.f32 %v160, %v159
    %v162 = vmul.f32 0.5, %v161
    %v163 = vsub.f32 1.5, %v162
    %v164 = vmul.f32 %v159, %v163
    %vm165 = vweird.f32 %v146
    %vm166 = vweird.f32 %v159
    %vm167 = vmor %vm165, %vm166
    %v168 = vsel %vm167, %v159, %v164
    %v169 = vrsqrt.pop %v147
    %v170 = vmul.f32 %v169, %v147
    %v171 = vmul.f32 %v170, %v169
    %v172 = vmul.f32 0.5, %v171
    %v173 = vsub.f32 1.5, %v172
    %v174 = vmul.f32 %v169, %v173
    %vm175 = vweird.f32 %v147
    %vm176 = vweird.f32 %v169
    %vm177 = vmor %vm175, %vm176
    %v178 = vsel %vm177, %v169, %v174
    %v179 = vrsqrt.pop %v148
    %v180 = vmul.f32 %v179, %v148
    %v181 = vmul.f32 %v180, %v179
    %v182 = vmul.f32 0.5, %v181
    %v183 = vsub.f32 1.5, %v182
    %v184 = vmul.f32 %v179, %v183
    %vm185 = vweird.f32 %v148
    %vm186 = vweird.f32 %v179
    %vm187 = vmor %vm185, %vm186
    %v188 = vsel %vm187, %v179, %v184
    %v193 = vrot.slane %v168, 4
    %v194 = vrot.slane %v188, 4
    %v195 = vsel %vm46, %v158, %v193
    %v196 = vsel %vm46, %v178, %v194
    %v199 = vmul.f32 %v96, %v195
    %v200 = vmul.f32 %v97, %v196
    %v201 = vld [vmem:[%s1] sm:$0xf]
    %203 = vset.pattern.permute.xlu0 0
    %204 = vperm.xlu0 %203, %v201
    %v205 = vpop.permute.xlu0 %204
    %v207 = vunpack.c.l.s4 839922192
    %v208 = vunpack.c.0.s8 %v207
    %v209 = vperm.slane %v205, %v208
    %v211 = vmul.f32 %v199, %v209
    %v212 = vmul.f32 %v200, %v209
    %v213 = vld [vmem:[%s2] sm:$0xf]
    %215 = vset.pattern.permute.xlu0 0
    %216 = vperm.xlu0 %215, %v213
    %v217 = vpop.permute.xlu0 %216
    %v219 = vunpack.c.l.s4 839922192
    %v220 = vunpack.c.0.s8 %v219
    %v221 = vperm.slane %v217, %v220
    %v223 = vadd.f32 %v211, %v221
    %v224 = vadd.f32 %v212, %v221
    %225 = vst [vmem:[#allocation5] sm:$0xff] %v223
    %226 = vst [vmem:[#allocation5 + $0x8] sm:$0xff] %v224
    // Predicated region
    $region18: #{tpu_custom_call.1} parent=1 // pred_check
      _
    $region19: #{tpu_custom_call.1} parent=1 // pred_check_branch
      %228 = sbr.rel (0) target = $region21
    $region20: #{tpu_custom_call.1} parent=1 // pred_region
      %230 = vsyncadd [#allocation4], 0
      %s231 = sshll.u32 [#allocation5], 4
      %s232 = int_to_ptr.vmem [resolvable:$true] %s231
      %s233 = sshll.u32 %s3, 4
      %s234 = int_to_ptr.hbm [resolvable:$true] %s233
      %239 = dma.vmem_to_hbm [thread:$0]  %s232, 256, %s234, [#allocation4], 128, 128, 8
    $region21: #{tpu_custom_call.1} parent=1 // pred_fallthru
      _
    // Predicated region
    $region22: #{tpu_custom_call.1} parent=1 // pred_check
      _
    $region23: #{tpu_custom_call.1} parent=1 // pred_check_branch
      %241 = sbr.rel (0) target = $region25
    $region24: #{tpu_custom_call.1} parent=1 // pred_region
      %243 = dma.done [#allocation4], 256
    $region25: #{tpu_custom_call.1} parent=1 // pred_fallthru
      _
    %244 = vsyncpa [#allocation3], 1
    %245 = vsyncpa [#allocation4], 1

</llo_original>
